<compile_context>
chip_gen: v6e
topology: v6e:2x2x1
jax: 0.10.0
libtpu: 0.0.40
codegen_flags: <defaults>
</compile_context>

<pallas_src>
import jax
import jax.numpy as jnp
from jax.experimental import pallas as pl
from jax.experimental.pallas import tpu as pltpu

LEAKY_SLOPE = 0.01
OUT_LANES = 128          # lane-dense output block width


def model_kernel(ids_ref,                                    # [B*S] int32 in SMEM (prefetch)
                 table_ref, gamma_ref, beta_ref,
                 w1_ref, b1_ref, w2_ref, b2_ref,
                 pool_ref, wr_ref, br_ref,
                 out_ref,
                 emb_ref):                                    # VMEM scratch [T, H] f32
    T, H = emb_ref.shape
    TB = pool_ref.shape[0]          # sequences (batches) in this tile
    S = T // TB                     # tokens per sequence
    base = pl.program_id(0) * T     # first token of this tile in the flat ids array

    # ---- Embedding gather: per-row copy from the VMEM-resident table ---------------
    # ids come from SMEM (scalar-indexed reads are cheap there); each row is a dynamic
    # sublane-offset [1, H] load from VMEM.  No [T, V] one-hot intermediate.
    def gather_row(t, carry):
        idx = ids_ref[base + t]
        emb_ref[pl.ds(t, 1), :] = table_ref[pl.ds(idx, 1), :]
        return carry
    jax.lax.fori_loop(0, T, gather_row, 0, unroll=(T <= 256))

    x = emb_ref[...]                                          # [T, H] f32

    # ---- LayerNorm over hidden dim (eps=1e-5, biased variance; f32) ----------------
    mu = jnp.mean(x, axis=-1, keepdims=True)
    xc = x - mu
    var = jnp.mean(xc * xc, axis=-1, keepdims=True)
    h = xc * jax.lax.rsqrt(var + 1e-5) * gamma_ref[...] + beta_ref[...]

    # ---- lin_1 + LeakyReLU (bf16 operands on the MXU, f32 accumulation) ------------
    h = jnp.dot(h.astype(jnp.bfloat16), w1_ref[...],
                preferred_element_type=jnp.float32) + b1_ref[...]
    h = jnp.maximum(h, LEAKY_SLOPE * h)

    # ---- lin_2 + LeakyReLU -----------------------------------------------------------
    h = jnp.dot(h.astype(jnp.bfloat16), w2_ref[...],
                preferred_element_type=jnp.float32) + b2_ref[...]
    h = jnp.maximum(h, LEAKY_SLOPE * h)

    # ---- mean over the sequence: precomputed bf16 0/1 pooling matrix, 1/S in f32 ---
    v = jnp.dot(pool_ref[...], h.astype(jnp.bfloat16),
                preferred_element_type=jnp.float32) * (1.0 / S)          # [TB, H]

    # ---- regression head (H -> 1) on the VPU/XLU; lane-dense broadcast store -------
    out = jnp.sum(v * wr_ref[...], axis=-1, keepdims=True) + br_ref[...]  # [TB, 1]
    out_ref[...] = jnp.broadcast_to(out, out_ref.shape).astype(out_ref.dtype)


def _choose_batch_tile(B, S, max_rows=1024, min_rows=128):
    """Whole sequences per grid step.

    Prefer >=2 grid steps with multiple-of-8 batch tiles and >=128 MXU rows per step
    (lets v7x shard the "parallel" axis across both TensorCores); otherwise run the
    whole problem in a single full tile.
    """
    cands = [tb for tb in range(8, B, 8) if B % tb == 0 and tb * S <= max_rows]
    multi = [tb for tb in cands if tb * S >= min_rows]
    if multi:
        return max(multi)            # >=2 steps, big tiles
    if B * S <= max_rows:
        return B                     # single step, whole problem fits comfortably
    if cands:
        return max(cands)
    # TODO(synk): also tile the sequence dim (accumulate pooled sums with pl.when
    # init/finalize) for very long S instead of one giant tile.
    return B


def test_model_forward(ids, params):
    B, S = ids.shape
    V, H = params["emb_table"].shape

    TB = _choose_batch_tile(B, S)       # batches (sequences) per grid step
    G = B // TB                         # grid steps
    T = TB * S                          # tokens per grid step (MXU M dimension)

    ids_flat = ids.reshape(B * S).astype(jnp.int32)            # scalar-prefetched (SMEM)
    gamma = params["ln_gamma"].reshape(1, H)
    beta = params["ln_beta"].reshape(1, H)
    w1 = params["w1"].astype(jnp.bfloat16)                     # bf16 at the dot, f32 accum
    b1 = params["b1"].reshape(1, H)
    w2 = params["w2"].astype(jnp.bfloat16)
    b2 = params["b2"].reshape(1, H)
    wr = params["w_reg"].reshape(1, H)                         # head as a row vector (VPU)
    br = params["b_reg"].reshape(1, 1)
    # Precomputed loop-invariant pooling matrix: pool[b, t] = 1 iff token t belongs to
    # sequence b of this tile (0/1 values are exact in bf16; 1/S applied in-kernel in f32).
    pool = jnp.repeat(jnp.eye(TB, dtype=jnp.float32), S, axis=1).astype(jnp.bfloat16)

    const = lambda i, ids_ref: (0, 0)   # resident blocks (weights / params / table)
    in_specs = [
        pl.BlockSpec((V, H), const),                   # embedding table (VMEM-resident)
        pl.BlockSpec((1, H), const),                   # ln gamma
        pl.BlockSpec((1, H), const),                   # ln beta
        pl.BlockSpec((H, H), const),                   # w1 (bf16)
        pl.BlockSpec((1, H), const),                   # b1
        pl.BlockSpec((H, H), const),                   # w2 (bf16)
        pl.BlockSpec((1, H), const),                   # b2
        pl.BlockSpec((TB, T), const),                  # pooling matrix (bf16, 0/1)
        pl.BlockSpec((1, H), const),                   # w_reg row
        pl.BlockSpec((1, 1), const),                   # b_reg
    ]
    out_specs = pl.BlockSpec((TB, OUT_LANES), lambda i, ids_ref: (i, 0))

    res = pl.pallas_call(
        model_kernel,
        out_shape=jax.ShapeDtypeStruct((B, OUT_LANES), jnp.float32),
        grid_spec=pltpu.PrefetchScalarGridSpec(
            num_scalar_prefetch=1,                     # ids -> SMEM, readable per token
            grid=(G,),
            in_specs=in_specs,
            out_specs=out_specs,
            scratch_shapes=[pltpu.VMEM((T, H), jnp.float32)],   # gathered embeddings
        ),
        compiler_params=pltpu.CompilerParams(
            dimension_semantics=("parallel",),         # independent batch tiles (v7x 2 TCs)
            vmem_limit_bytes=32 * 1024 * 1024,
        ),
    )(ids_flat, params["emb_table"], gamma, beta, w1, b1, w2, b2, pool, wr, br)

    return res[:, :1]                                   # (B, 1)


def reference_forward(ids, params):
    # Pure-JAX f32 reference (PyTorch semantics).
    h = jnp.take(params["emb_table"], ids, axis=0)
    mu = jnp.mean(h, axis=-1, keepdims=True)
    var = jnp.mean((h - mu) ** 2, axis=-1, keepdims=True)
    h = (h - mu) / jnp.sqrt(var + 1e-5) * params["ln_gamma"] + params["ln_beta"]
    h = h @ params["w1"] + params["b1"]
    h = jnp.where(h > 0, h, 0.01 * h)
    h = h @ params["w2"] + params["b2"]
    h = jnp.where(h > 0, h, 0.01 * h)
    v = jnp.mean(h, axis=1)
    return v @ params["w_reg"] + params["b_reg"]


if __name__ == "__main__":
    B, S, H, V = 2, 8, 128, 64   # batch, seq, hidden_size, vocab_size

    key = jax.random.PRNGKey(0)
    ks = jax.random.split(key, 8)
    params = {
        "emb_table": jax.random.normal(ks[0], (V, H), jnp.float32) * 0.02,
        "ln_gamma":  jnp.ones((H,), jnp.float32),
        "ln_beta":   jnp.zeros((H,), jnp.float32),
        "w1":        jax.random.normal(ks[1], (H, H), jnp.float32) / jnp.sqrt(H),
        "b1":        jax.random.normal(ks[2], (H,), jnp.float32) * 0.01,
        "w2":        jax.random.normal(ks[3], (H, H), jnp.float32) / jnp.sqrt(H),
        "b2":        jax.random.normal(ks[4], (H,), jnp.float32) * 0.01,
        "w_reg":     jax.random.normal(ks[5], (H, 1), jnp.float32) / jnp.sqrt(H),
        "b_reg":     jax.random.normal(ks[6], (1,), jnp.float32) * 0.01,
    }
    ids = jax.random.randint(ks[7], (B, S), 0, V, dtype=jnp.int32)

    out = jax.block_until_ready(test_model_forward(ids, params))
    ref = jax.block_until_ready(reference_forward(ids, params))

    assert out.shape == (B, 1), out.shape
    # bf16 operands at the MXU dots (f32 accumulation) -> tolerance loosened vs pure f32.
    assert jnp.allclose(out, ref, atol=3e-2, rtol=3e-2), (out, ref)
    print("KERNEL_OK")
</pallas_src>

<mosaic_0001>
module attributes {stable_mosaic.version = 11 : i64} {
  func.func @model_kernel(%arg0: i32, %arg1: memref<16xi32, #tpu.memory_space<smem>>, %arg2: memref<64x128xf32, #tpu.memory_space<vmem>>, %arg3: memref<1x128xf32, #tpu.memory_space<vmem>>, %arg4: memref<1x128xf32, #tpu.memory_space<vmem>>, %arg5: memref<128x128xbf16, #tpu.memory_space<vmem>>, %arg6: memref<1x128xf32, #tpu.memory_space<vmem>>, %arg7: memref<128x128xbf16, #tpu.memory_space<vmem>>, %arg8: memref<1x128xf32, #tpu.memory_space<vmem>>, %arg9: memref<2x16xbf16, #tpu.memory_space<vmem>>, %arg10: memref<1x128xf32, #tpu.memory_space<vmem>>, %arg11: memref<1x1xf32, #tpu.memory_space<vmem>>, %arg12: memref<2x128xf32, #tpu.memory_space<vmem>>, %arg13: memref<16x128xf32, #tpu.memory_space<vmem>>) attributes {dimension_semantics = [#tpu.dimension_semantics<parallel>], iteration_bounds = array<i64: 1>, scalar_prefetch = 1 : i64, scratch_operands = 1 : i64, tpu.core_type = #tpu.core_type<tc>, window_params = [{pipeline_mode = #tpu.pipeline_mode<synchronous>, transform_indices = @transform_0, window_bounds = array<i64: 64, 128>}, {pipeline_mode = #tpu.pipeline_mode<synchronous>, transform_indices = @transform_1, window_bounds = array<i64: 1, 128>}, {pipeline_mode = #tpu.pipeline_mode<synchronous>, transform_indices = @transform_2, window_bounds = array<i64: 1, 128>}, {pipeline_mode = #tpu.pipeline_mode<synchronous>, transform_indices = @transform_3, window_bounds = array<i64: 128, 128>}, {pipeline_mode = #tpu.pipeline_mode<synchronous>, transform_indices = @transform_4, window_bounds = array<i64: 1, 128>}, {pipeline_mode = #tpu.pipeline_mode<synchronous>, transform_indices = @transform_5, window_bounds = array<i64: 128, 128>}, {pipeline_mode = #tpu.pipeline_mode<synchronous>, transform_indices = @transform_6, window_bounds = array<i64: 1, 128>}, {pipeline_mode = #tpu.pipeline_mode<synchronous>, transform_indices = @transform_7, window_bounds = array<i64: 2, 16>}, {pipeline_mode = #tpu.pipeline_mode<synchronous>, transform_indices = @transform_8, window_bounds = array<i64: 1, 128>}, {pipeline_mode = #tpu.pipeline_mode<synchronous>, transform_indices = @transform_9, window_bounds = array<i64: 1, 1>}, {transform_indices = @transform_10, window_bounds = array<i64: 2, 128>}]} {
    %c16_i32 = arith.constant 16 : i32
    %0 = arith.muli %arg0, %c16_i32 : i32
    %c0_i32 = arith.constant 0 : i32
    %1 = arith.addi %0, %c0_i32 : i32
    %2 = arith.index_cast %1 : i32 to index
    %3 = memref.load %arg1[%2] : memref<16xi32, #tpu.memory_space<smem>>
    %4 = arith.index_cast %3 : i32 to index
    %c0 = arith.constant 0 : index
    %5 = vector.load %arg2[%4, %c0] : memref<64x128xf32, #tpu.memory_space<vmem>>, vector<1x128xf32>
    %6 = arith.index_cast %c0_i32 : i32 to index
    %c0_0 = arith.constant 0 : index
    %7 = vector.load %arg13[%6, %c0_0] : memref<16x128xf32, #tpu.memory_space<vmem>>, vector<1x128xf32>
    tpu.vector_store %arg13[%6, %c0_0], %5 {strides = array<i32>} : memref<16x128xf32, #tpu.memory_space<vmem>>, vector<1x128xf32>,
    %c1_i32 = arith.constant 1 : i32
    %8 = arith.addi %0, %c1_i32 : i32
    %9 = arith.index_cast %8 : i32 to index
    %10 = memref.load %arg1[%9] : memref<16xi32, #tpu.memory_space<smem>>
    %11 = arith.index_cast %10 : i32 to index
    %c0_1 = arith.constant 0 : index
    %12 = vector.load %arg2[%11, %c0_1] : memref<64x128xf32, #tpu.memory_space<vmem>>, vector<1x128xf32>
    %13 = arith.index_cast %c1_i32 : i32 to index
    %c0_2 = arith.constant 0 : index
    %14 = vector.load %arg13[%13, %c0_2] : memref<16x128xf32, #tpu.memory_space<vmem>>, vector<1x128xf32>
    tpu.vector_store %arg13[%13, %c0_2], %12 {strides = array<i32>} : memref<16x128xf32, #tpu.memory_space<vmem>>, vector<1x128xf32>,
    %c2_i32 = arith.constant 2 : i32
    %15 = arith.addi %0, %c2_i32 : i32
    %16 = arith.index_cast %15 : i32 to index
    %17 = memref.load %arg1[%16] : memref<16xi32, #tpu.memory_space<smem>>
    %18 = arith.index_cast %17 : i32 to index
    %c0_3 = arith.constant 0 : index
    %19 = vector.load %arg2[%18, %c0_3] : memref<64x128xf32, #tpu.memory_space<vmem>>, vector<1x128xf32>
    %20 = arith.index_cast %c2_i32 : i32 to index
    %c0_4 = arith.constant 0 : index
    %21 = vector.load %arg13[%20, %c0_4] : memref<16x128xf32, #tpu.memory_space<vmem>>, vector<1x128xf32>
    tpu.vector_store %arg13[%20, %c0_4], %19 {strides = array<i32>} : memref<16x128xf32, #tpu.memory_space<vmem>>, vector<1x128xf32>,
    %c3_i32 = arith.constant 3 : i32
    %22 = arith.addi %0, %c3_i32 : i32
    %23 = arith.index_cast %22 : i32 to index
    %24 = memref.load %arg1[%23] : memref<16xi32, #tpu.memory_space<smem>>
    %25 = arith.index_cast %24 : i32 to index
    %c0_5 = arith.constant 0 : index
    %26 = vector.load %arg2[%25, %c0_5] : memref<64x128xf32, #tpu.memory_space<vmem>>, vector<1x128xf32>
    %27 = arith.index_cast %c3_i32 : i32 to index
    %c0_6 = arith.constant 0 : index
    %28 = vector.load %arg13[%27, %c0_6] : memref<16x128xf32, #tpu.memory_space<vmem>>, vector<1x128xf32>
    tpu.vector_store %arg13[%27, %c0_6], %26 {strides = array<i32>} : memref<16x128xf32, #tpu.memory_space<vmem>>, vector<1x128xf32>,
    %c4_i32 = arith.constant 4 : i32
    %29 = arith.addi %0, %c4_i32 : i32
    %30 = arith.index_cast %29 : i32 to index
    %31 = memref.load %arg1[%30] : memref<16xi32, #tpu.memory_space<smem>>
    %32 = arith.index_cast %31 : i32 to index
    %c0_7 = arith.constant 0 : index
    %33 = vector.load %arg2[%32, %c0_7] : memref<64x128xf32, #tpu.memory_space<vmem>>, vector<1x128xf32>
    %34 = arith.index_cast %c4_i32 : i32 to index
    %c0_8 = arith.constant 0 : index
    %35 = vector.load %arg13[%34, %c0_8] : memref<16x128xf32, #tpu.memory_space<vmem>>, vector<1x128xf32>
    tpu.vector_store %arg13[%34, %c0_8], %33 {strides = array<i32>} : memref<16x128xf32, #tpu.memory_space<vmem>>, vector<1x128xf32>,
    %c5_i32 = arith.constant 5 : i32
    %36 = arith.addi %0, %c5_i32 : i32
    %37 = arith.index_cast %36 : i32 to index
    %38 = memref.load %arg1[%37] : memref<16xi32, #tpu.memory_space<smem>>
    %39 = arith.index_cast %38 : i32 to index
    %c0_9 = arith.constant 0 : index
    %40 = vector.load %arg2[%39, %c0_9] : memref<64x128xf32, #tpu.memory_space<vmem>>, vector<1x128xf32>
    %41 = arith.index_cast %c5_i32 : i32 to index
    %c0_10 = arith.constant 0 : index
    %42 = vector.load %arg13[%41, %c0_10] : memref<16x128xf32, #tpu.memory_space<vmem>>, vector<1x128xf32>
    tpu.vector_store %arg13[%41, %c0_10], %40 {strides = array<i32>} : memref<16x128xf32, #tpu.memory_space<vmem>>, vector<1x128xf32>,
    %c6_i32 = arith.constant 6 : i32
    %43 = arith.addi %0, %c6_i32 : i32
    %44 = arith.index_cast %43 : i32 to index
    %45 = memref.load %arg1[%44] : memref<16xi32, #tpu.memory_space<smem>>
    %46 = arith.index_cast %45 : i32 to index
    %c0_11 = arith.constant 0 : index
    %47 = vector.load %arg2[%46, %c0_11] : memref<64x128xf32, #tpu.memory_space<vmem>>, vector<1x128xf32>
    %48 = arith.index_cast %c6_i32 : i32 to index
    %c0_12 = arith.constant 0 : index
    %49 = vector.load %arg13[%48, %c0_12] : memref<16x128xf32, #tpu.memory_space<vmem>>, vector<1x128xf32>
    tpu.vector_store %arg13[%48, %c0_12], %47 {strides = array<i32>} : memref<16x128xf32, #tpu.memory_space<vmem>>, vector<1x128xf32>,
    %c7_i32 = arith.constant 7 : i32
    %50 = arith.addi %0, %c7_i32 : i32
    %51 = arith.index_cast %50 : i32 to index
    %52 = memref.load %arg1[%51] : memref<16xi32, #tpu.memory_space<smem>>
    %53 = arith.index_cast %52 : i32 to index
    %c0_13 = arith.constant 0 : index
    %54 = vector.load %arg2[%53, %c0_13] : memref<64x128xf32, #tpu.memory_space<vmem>>, vector<1x128xf32>
    %55 = arith.index_cast %c7_i32 : i32 to index
    %c0_14 = arith.constant 0 : index
    %56 = vector.load %arg13[%55, %c0_14] : memref<16x128xf32, #tpu.memory_space<vmem>>, vector<1x128xf32>
    tpu.vector_store %arg13[%55, %c0_14], %54 {strides = array<i32>} : memref<16x128xf32, #tpu.memory_space<vmem>>, vector<1x128xf32>,
    %c8_i32 = arith.constant 8 : i32
    %57 = arith.addi %0, %c8_i32 : i32
    %58 = arith.index_cast %57 : i32 to index
    %59 = memref.load %arg1[%58] : memref<16xi32, #tpu.memory_space<smem>>
    %60 = arith.index_cast %59 : i32 to index
    %c0_15 = arith.constant 0 : index
    %61 = vector.load %arg2[%60, %c0_15] : memref<64x128xf32, #tpu.memory_space<vmem>>, vector<1x128xf32>
    %62 = arith.index_cast %c8_i32 : i32 to index
    %c0_16 = arith.constant 0 : index
    %63 = vector.load %arg13[%62, %c0_16] : memref<16x128xf32, #tpu.memory_space<vmem>>, vector<1x128xf32>
    tpu.vector_store %arg13[%62, %c0_16], %61 {strides = array<i32>} : memref<16x128xf32, #tpu.memory_space<vmem>>, vector<1x128xf32>,
    %c9_i32 = arith.constant 9 : i32
    %64 = arith.addi %0, %c9_i32 : i32
    %65 = arith.index_cast %64 : i32 to index
    %66 = memref.load %arg1[%65] : memref<16xi32, #tpu.memory_space<smem>>
    %67 = arith.index_cast %66 : i32 to index
    %c0_17 = arith.constant 0 : index
    %68 = vector.load %arg2[%67, %c0_17] : memref<64x128xf32, #tpu.memory_space<vmem>>, vector<1x128xf32>
    %69 = arith.index_cast %c9_i32 : i32 to index
    %c0_18 = arith.constant 0 : index
    %70 = vector.load %arg13[%69, %c0_18] : memref<16x128xf32, #tpu.memory_space<vmem>>, vector<1x128xf32>
    tpu.vector_store %arg13[%69, %c0_18], %68 {strides = array<i32>} : memref<16x128xf32, #tpu.memory_space<vmem>>, vector<1x128xf32>,
    %c10_i32 = arith.constant 10 : i32
    %71 = arith.addi %0, %c10_i32 : i32
    %72 = arith.index_cast %71 : i32 to index
    %73 = memref.load %arg1[%72] : memref<16xi32, #tpu.memory_space<smem>>
    %74 = arith.index_cast %73 : i32 to index
    %c0_19 = arith.constant 0 : index
    %75 = vector.load %arg2[%74, %c0_19] : memref<64x128xf32, #tpu.memory_space<vmem>>, vector<1x128xf32>
    %76 = arith.index_cast %c10_i32 : i32 to index
    %c0_20 = arith.constant 0 : index
    %77 = vector.load %arg13[%76, %c0_20] : memref<16x128xf32, #tpu.memory_space<vmem>>, vector<1x128xf32>
    tpu.vector_store %arg13[%76, %c0_20], %75 {strides = array<i32>} : memref<16x128xf32, #tpu.memory_space<vmem>>, vector<1x128xf32>,
    %c11_i32 = arith.constant 11 : i32
    %78 = arith.addi %0, %c11_i32 : i32
    %79 = arith.index_cast %78 : i32 to index
    %80 = memref.load %arg1[%79] : memref<16xi32, #tpu.memory_space<smem>>
    %81 = arith.index_cast %80 : i32 to index
    %c0_21 = arith.constant 0 : index
    %82 = vector.load %arg2[%81, %c0_21] : memref<64x128xf32, #tpu.memory_space<vmem>>, vector<1x128xf32>
    %83 = arith.index_cast %c11_i32 : i32 to index
    %c0_22 = arith.constant 0 : index
    %84 = vector.load %arg13[%83, %c0_22] : memref<16x128xf32, #tpu.memory_space<vmem>>, vector<1x128xf32>
    tpu.vector_store %arg13[%83, %c0_22], %82 {strides = array<i32>} : memref<16x128xf32, #tpu.memory_space<vmem>>, vector<1x128xf32>,
    %c12_i32 = arith.constant 12 : i32
    %85 = arith.addi %0, %c12_i32 : i32
    %86 = arith.index_cast %85 : i32 to index
    %87 = memref.load %arg1[%86] : memref<16xi32, #tpu.memory_space<smem>>
    %88 = arith.index_cast %87 : i32 to index
    %c0_23 = arith.constant 0 : index
    %89 = vector.load %arg2[%88, %c0_23] : memref<64x128xf32, #tpu.memory_space<vmem>>, vector<1x128xf32>
    %90 = arith.index_cast %c12_i32 : i32 to index
    %c0_24 = arith.constant 0 : index
    %91 = vector.load %arg13[%90, %c0_24] : memref<16x128xf32, #tpu.memory_space<vmem>>, vector<1x128xf32>
    tpu.vector_store %arg13[%90, %c0_24], %89 {strides = array<i32>} : memref<16x128xf32, #tpu.memory_space<vmem>>, vector<1x128xf32>,
    %c13_i32 = arith.constant 13 : i32
    %92 = arith.addi %0, %c13_i32 : i32
    %93 = arith.index_cast %92 : i32 to index
    %94 = memref.load %arg1[%93] : memref<16xi32, #tpu.memory_space<smem>>
    %95 = arith.index_cast %94 : i32 to index
    %c0_25 = arith.constant 0 : index
    %96 = vector.load %arg2[%95, %c0_25] : memref<64x128xf32, #tpu.memory_space<vmem>>, vector<1x128xf32>
    %97 = arith.index_cast %c13_i32 : i32 to index
    %c0_26 = arith.constant 0 : index
    %98 = vector.load %arg13[%97, %c0_26] : memref<16x128xf32, #tpu.memory_space<vmem>>, vector<1x128xf32>
    tpu.vector_store %arg13[%97, %c0_26], %96 {strides = array<i32>} : memref<16x128xf32, #tpu.memory_space<vmem>>, vector<1x128xf32>,
    %c14_i32 = arith.constant 14 : i32
    %99 = arith.addi %0, %c14_i32 : i32
    %100 = arith.index_cast %99 : i32 to index
    %101 = memref.load %arg1[%100] : memref<16xi32, #tpu.memory_space<smem>>
    %102 = arith.index_cast %101 : i32 to index
    %c0_27 = arith.constant 0 : index
    %103 = vector.load %arg2[%102, %c0_27] : memref<64x128xf32, #tpu.memory_space<vmem>>, vector<1x128xf32>
    %104 = arith.index_cast %c14_i32 : i32 to index
    %c0_28 = arith.constant 0 : index
    %105 = vector.load %arg13[%104, %c0_28] : memref<16x128xf32, #tpu.memory_space<vmem>>, vector<1x128xf32>
    tpu.vector_store %arg13[%104, %c0_28], %103 {strides = array<i32>} : memref<16x128xf32, #tpu.memory_space<vmem>>, vector<1x128xf32>,
    %c15_i32 = arith.constant 15 : i32
    %106 = arith.addi %0, %c15_i32 : i32
    %107 = arith.index_cast %106 : i32 to index
    %108 = memref.load %arg1[%107] : memref<16xi32, #tpu.memory_space<smem>>
    %109 = arith.index_cast %108 : i32 to index
    %c0_29 = arith.constant 0 : index
    %110 = vector.load %arg2[%109, %c0_29] : memref<64x128xf32, #tpu.memory_space<vmem>>, vector<1x128xf32>
    %111 = arith.index_cast %c15_i32 : i32 to index
    %c0_30 = arith.constant 0 : index
    %112 = vector.load %arg13[%111, %c0_30] : memref<16x128xf32, #tpu.memory_space<vmem>>, vector<1x128xf32>
    tpu.vector_store %arg13[%111, %c0_30], %110 {strides = array<i32>} : memref<16x128xf32, #tpu.memory_space<vmem>>, vector<1x128xf32>,
    %c16_i32_31 = arith.constant 16 : i32
    %c0_32 = arith.constant 0 : index
    %c0_33 = arith.constant 0 : index
    %113 = vector.load %arg13[%c0_32, %c0_33] : memref<16x128xf32, #tpu.memory_space<vmem>>, vector<16x128xf32>
    %cst = arith.constant dense<0.000000e+00> : vector<16xf32>
    %114 = vector.multi_reduction <add>, %113, %cst [1] : vector<16x128xf32> to vector<16xf32>
    %115 = vector.shape_cast %114 : vector<16xf32> to vector<16x1xf32>
    %cst_34 = arith.constant 1.280000e+02 : f32
    %116 = vector.broadcast %cst_34 : f32 to vector<16x1xf32>
    %117 = arith.divf %115, %116 : vector<16x1xf32>
    %118 = vector.broadcast %117 : vector<16x1xf32> to vector<16x128xf32>
    %119 = arith.subf %113, %118 : vector<16x128xf32>
    %120 = arith.mulf %119, %119 : vector<16x128xf32>
    %cst_35 = arith.constant dense<0.000000e+00> : vector<16xf32>
    %121 = vector.multi_reduction <add>, %120, %cst_35 [1] : vector<16x128xf32> to vector<16xf32>
    %122 = vector.shape_cast %121 : vector<16xf32> to vector<16x1xf32>
    %cst_36 = arith.constant 1.280000e+02 : f32
    %123 = vector.broadcast %cst_36 : f32 to vector<16x1xf32>
    %124 = arith.divf %122, %123 : vector<16x1xf32>
    %cst_37 = arith.constant 9.99999974E-6 : f32
    %125 = vector.broadcast %cst_37 : f32 to vector<16x1xf32>
    %126 = arith.addf %124, %125 : vector<16x1xf32>
    %127 = math.rsqrt %126 : vector<16x1xf32>
    %128 = vector.broadcast %127 : vector<16x1xf32> to vector<16x128xf32>
    %129 = arith.mulf %119, %128 : vector<16x128xf32>
    %c0_38 = arith.constant 0 : index
    %c0_39 = arith.constant 0 : index
    %130 = vector.load %arg3[%c0_38, %c0_39] : memref<1x128xf32, #tpu.memory_space<vmem>>, vector<1x128xf32>
    %131 = vector.broadcast %130 : vector<1x128xf32> to vector<16x128xf32>
    %132 = arith.mulf %129, %131 : vector<16x128xf32>
    %c0_40 = arith.constant 0 : index
    %c0_41 = arith.constant 0 : index
    %133 = vector.load %arg4[%c0_40, %c0_41] : memref<1x128xf32, #tpu.memory_space<vmem>>, vector<1x128xf32>
    %134 = vector.broadcast %133 : vector<1x128xf32> to vector<16x128xf32>
    %135 = arith.addf %132, %134 : vector<16x128xf32>
    %136 = arith.truncf %135 : vector<16x128xf32> to vector<16x128xbf16>
    %c0_42 = arith.constant 0 : index
    %c0_43 = arith.constant 0 : index
    %137 = vector.load %arg5[%c0_42, %c0_43] : memref<128x128xbf16, #tpu.memory_space<vmem>>, vector<128x128xbf16>
    %cst_44 = arith.constant dense<0.000000e+00> : vector<16x128xf32>
    %138 = tpu.matmul %136, %137, %cst_44 {dimension_numbers = #tpu.dot_dimension_numbers<[1], [0], [0], [1], [0, 0, 1, 1], [], []>} : vector<16x128xbf16>, vector<128x128xbf16>, vector<16x128xf32> -> vector<16x128xf32>
    %c0_45 = arith.constant 0 : index
    %c0_46 = arith.constant 0 : index
    %139 = vector.load %arg6[%c0_45, %c0_46] : memref<1x128xf32, #tpu.memory_space<vmem>>, vector<1x128xf32>
    %140 = vector.broadcast %139 : vector<1x128xf32> to vector<16x128xf32>
    %141 = arith.addf %138, %140 : vector<16x128xf32>
    %cst_47 = arith.constant 0.00999999977 : f32
    %142 = vector.broadcast %cst_47 : f32 to vector<16x128xf32>
    %143 = arith.mulf %142, %141 : vector<16x128xf32>
    %144 = arith.maximumf %141, %143 : vector<16x128xf32>
    %145 = arith.truncf %144 : vector<16x128xf32> to vector<16x128xbf16>
    %c0_48 = arith.constant 0 : index
    %c0_49 = arith.constant 0 : index
    %146 = vector.load %arg7[%c0_48, %c0_49] : memref<128x128xbf16, #tpu.memory_space<vmem>>, vector<128x128xbf16>
    %cst_50 = arith.constant dense<0.000000e+00> : vector<16x128xf32>
    %147 = tpu.matmul %145, %146, %cst_50 {dimension_numbers = #tpu.dot_dimension_numbers<[1], [0], [0], [1], [0, 0, 1, 1], [], []>} : vector<16x128xbf16>, vector<128x128xbf16>, vector<16x128xf32> -> vector<16x128xf32>
    %c0_51 = arith.constant 0 : index
    %c0_52 = arith.constant 0 : index
    %148 = vector.load %arg8[%c0_51, %c0_52] : memref<1x128xf32, #tpu.memory_space<vmem>>, vector<1x128xf32>
    %149 = vector.broadcast %148 : vector<1x128xf32> to vector<16x128xf32>
    %150 = arith.addf %147, %149 : vector<16x128xf32>
    %cst_53 = arith.constant 0.00999999977 : f32
    %151 = vector.broadcast %cst_53 : f32 to vector<16x128xf32>
    %152 = arith.mulf %151, %150 : vector<16x128xf32>
    %153 = arith.maximumf %150, %152 : vector<16x128xf32>
    %c0_54 = arith.constant 0 : index
    %c0_55 = arith.constant 0 : index
    %154 = vector.load %arg9[%c0_54, %c0_55] : memref<2x16xbf16, #tpu.memory_space<vmem>>, vector<2x16xbf16>
    %155 = arith.truncf %153 : vector<16x128xf32> to vector<16x128xbf16>
    %cst_56 = arith.constant dense<0.000000e+00> : vector<2x128xf32>
    %156 = tpu.matmul %154, %155, %cst_56 {dimension_numbers = #tpu.dot_dimension_numbers<[1], [0], [0], [1], [0, 0, 1, 1], [], []>} : vector<2x16xbf16>, vector<16x128xbf16>, vector<2x128xf32> -> vector<2x128xf32>
    %cst_57 = arith.constant 1.250000e-01 : f32
    %157 = vector.broadcast %cst_57 : f32 to vector<2x128xf32>
    %158 = arith.mulf %156, %157 : vector<2x128xf32>
    %c0_58 = arith.constant 0 : index
    %c0_59 = arith.constant 0 : index
    %159 = vector.load %arg10[%c0_58, %c0_59] : memref<1x128xf32, #tpu.memory_space<vmem>>, vector<1x128xf32>
    %160 = vector.broadcast %159 : vector<1x128xf32> to vector<2x128xf32>
    %161 = arith.mulf %158, %160 : vector<2x128xf32>
    %cst_60 = arith.constant dense<0.000000e+00> : vector<2xf32>
    %162 = vector.multi_reduction <add>, %161, %cst_60 [1] : vector<2x128xf32> to vector<2xf32>
    %163 = vector.shape_cast %162 : vector<2xf32> to vector<2x1xf32>
    %c0_61 = arith.constant 0 : index
    %c0_62 = arith.constant 0 : index
    %164 = vector.load %arg11[%c0_61, %c0_62] : memref<1x1xf32, #tpu.memory_space<vmem>>, vector<1x1xf32>
    %165 = vector.broadcast %164 : vector<1x1xf32> to vector<2x1xf32>
    %166 = arith.addf %163, %165 : vector<2x1xf32>
    %167 = vector.shape_cast %166 : vector<2x1xf32> to vector<2x1xf32>
    %168 = vector.broadcast %167 : vector<2x1xf32> to vector<2x128xf32>
    %c0_63 = arith.constant 0 : index
    %c0_64 = arith.constant 0 : index
    %169 = vector.load %arg12[%c0_63, %c0_64] : memref<2x128xf32, #tpu.memory_space<vmem>>, vector<2x128xf32>
    tpu.vector_store %arg12[%c0_63, %c0_64], %168 {strides = array<i32>} : memref<2x128xf32, #tpu.memory_space<vmem>>, vector<2x128xf32>,
    return
  }
  func.func @transform_0(%arg0: i32, %arg1: memref<16xi32, #tpu.memory_space<smem>>) -> (i32, i32) {
    %c0_i32 = arith.constant 0 : i32
    %c0_i32_0 = arith.constant 0 : i32
    %c0_i32_1 = arith.constant 0 : i32
    return %c0_i32, %c0_i32_0 : i32, i32
  }
  func.func @transform_1(%arg0: i32, %arg1: memref<16xi32, #tpu.memory_space<smem>>) -> (i32, i32) {
    %c0_i32 = arith.constant 0 : i32
    %c0_i32_0 = arith.constant 0 : i32
    %c0_i32_1 = arith.constant 0 : i32
    return %c0_i32, %c0_i32_0 : i32, i32
  }
  func.func @transform_2(%arg0: i32, %arg1: memref<16xi32, #tpu.memory_space<smem>>) -> (i32, i32) {
    %c0_i32 = arith.constant 0 : i32
    %c0_i32_0 = arith.constant 0 : i32
    %c0_i32_1 = arith.constant 0 : i32
    return %c0_i32, %c0_i32_0 : i32, i32
  }
  func.func @transform_3(%arg0: i32, %arg1: memref<16xi32, #tpu.memory_space<smem>>) -> (i32, i32) {
    %c0_i32 = arith.constant 0 : i32
    %c0_i32_0 = arith.constant 0 : i32
    %c0_i32_1 = arith.constant 0 : i32
    return %c0_i32, %c0_i32_0 : i32, i32
  }
  func.func @transform_4(%arg0: i32, %arg1: memref<16xi32, #tpu.memory_space<smem>>) -> (i32, i32) {
    %c0_i32 = arith.constant 0 : i32
    %c0_i32_0 = arith.constant 0 : i32
    %c0_i32_1 = arith.constant 0 : i32
    return %c0_i32, %c0_i32_0 : i32, i32
  }
  func.func @transform_5(%arg0: i32, %arg1: memref<16xi32, #tpu.memory_space<smem>>) -> (i32, i32) {
    %c0_i32 = arith.constant 0 : i32
    %c0_i32_0 = arith.constant 0 : i32
    %c0_i32_1 = arith.constant 0 : i32
    return %c0_i32, %c0_i32_0 : i32, i32
  }
  func.func @transform_6(%arg0: i32, %arg1: memref<16xi32, #tpu.memory_space<smem>>) -> (i32, i32) {
    %c0_i32 = arith.constant 0 : i32
    %c0_i32_0 = arith.constant 0 : i32
    %c0_i32_1 = arith.constant 0 : i32
    return %c0_i32, %c0_i32_0 : i32, i32
  }
  func.func @transform_7(%arg0: i32, %arg1: memref<16xi32, #tpu.memory_space<smem>>) -> (i32, i32) {
    %c0_i32 = arith.constant 0 : i32
    %c0_i32_0 = arith.constant 0 : i32
    %c0_i32_1 = arith.constant 0 : i32
    return %c0_i32, %c0_i32_0 : i32, i32
  }
  func.func @transform_8(%arg0: i32, %arg1: memref<16xi32, #tpu.memory_space<smem>>) -> (i32, i32) {
    %c0_i32 = arith.constant 0 : i32
    %c0_i32_0 = arith.constant 0 : i32
    %c0_i32_1 = arith.constant 0 : i32
    return %c0_i32, %c0_i32_0 : i32, i32
  }
  func.func @transform_9(%arg0: i32, %arg1: memref<16xi32, #tpu.memory_space<smem>>) -> (i32, i32) {
    %c0_i32 = arith.constant 0 : i32
    %c0_i32_0 = arith.constant 0 : i32
    %c0_i32_1 = arith.constant 0 : i32
    return %c0_i32, %c0_i32_0 : i32, i32
  }
  func.func @transform_10(%arg0: i32, %arg1: memref<16xi32, #tpu.memory_space<smem>>) -> (i32, i32) {
    %c0_i32 = arith.constant 0 : i32
    %c0_i32_0 = arith.constant 0 : i32
    return %arg0, %c0_i32 : i32, i32
  }
}

</mosaic_0001>

<llo_original>
// kernel: tpu_custom_call.1
$region0: #{tpu_custom_call.1}
  #allocation0 [shape = 'u32[]', space=smem, size = 0x4, offset = 0x4, fixed_abs, tag = 'smem constant byte address 0x4 - core index']
  #allocation1 [shape = 'u32[144,128]{1,0:T(1,128)}', space=vmem, size = 0x12000, scoped, tag = 'internal scratch']
  #allocation2 [shape = 'f32[16,128]{1,0:T(8,128)}', space=vmem, size = 0x2000, scoped, tag = 'scratch operand']
  #allocation3 [shape = 's32[1]{0}', space=sflag, size = 0x4, scoped, tag = 'scoped memory for tpu_custom_call.1']
  #allocation4 [shape = 'u8[512]{0}', space=smem, size = 0x200, scoped, tag = 'prefetched SMEM operand 0']
  #allocation5 [shape = 'f32[1,1]{1,0:T(1,128)S(1)}', space=vmem, size = 0x200, scoped, tag = 'scoped memory for tpu_custom_call.1']
  %s0 = inlined_call_operand.vmem [shape: s32[16], index: 0, kind: input, shape index: {}]
  %s1 = inlined_call_operand.hbm [shape: f32[64,128], index: 1, kind: input, shape index: {}]
  %s2 = inlined_call_operand.vmem [shape: f32[1,128], index: 2, kind: input, shape index: {}]
  %s3 = inlined_call_operand.vmem [shape: f32[1,128], index: 3, kind: input, shape index: {}]
  %s4 = inlined_call_operand.hbm [shape: bf16[128,128], index: 4, kind: input, shape index: {}]
  %s5 = inlined_call_operand.vmem [shape: f32[1,128], index: 5, kind: input, shape index: {}]
  %s6 = inlined_call_operand.hbm [shape: bf16[128,128], index: 6, kind: input, shape index: {}]
  %s7 = inlined_call_operand.vmem [shape: f32[1,128], index: 7, kind: input, shape index: {}]
  %s8 = inlined_call_operand.vmem [shape: bf16[2,16], index: 8, kind: input, shape index: {}]
  %s9 = inlined_call_operand.vmem [shape: f32[1,128], index: 9, kind: input, shape index: {}]
  %s10 = inlined_call_operand.<no memory space> [shape: f32[1,1], index: 10, kind: input, shape index: {}]
  %s11 = inlined_call_operand.hbm [shape: f32[2,128], index: 11, kind: output, shape index: {}]
  %s12 = sld [smem:[#allocation0]]
  $region62: #{tpu_custom_call.1} parent=0
    _
  %s14 = ssub.s32 1, %s12
  %s15 = scalar_select 0, %s14, %s12
  %s16 = sshll.u32 %s0, 4
  %s17 = int_to_ptr.vmem [resolvable:$true] %s16
  %19 = dma.vmem_to_smem %s17, 16, [#allocation4], [#allocation3]
  %v20 = vstv %s10
  %21 = vst [vmem:[#allocation5] sm:$0x1] %v20
  %22 = dma.done [#allocation3], 16
  %23 = sfence
  $region1: #{tpu_custom_call.1} parent=0
    #allocation6 [shape = 'u8[32768]{0}', space=vmem, size = 0x8000, scoped, tag = 'input window, operand 1, single buffered']
    #allocation7 [shape = 's32[1]{0}', space=sflag, size = 0x4, scoped, tag = 'scoped memory for tpu_custom_call.1']
    #allocation8 [shape = 's32[1]{0}', space=sflag, size = 0x4, scoped, tag = 'scoped memory for tpu_custom_call.1']
    #allocation9 [shape = 'u8[32768]{0}', space=vmem, size = 0x8000, scoped, tag = 'input window, operand 4, single buffered']
    #allocation10 [shape = 's32[1]{0}', space=sflag, size = 0x4, scoped, tag = 'scoped memory for tpu_custom_call.1']
    #allocation11 [shape = 'u8[32768]{0}', space=vmem, size = 0x8000, scoped, tag = 'input window, operand 6, single buffered']
    #allocation12 [shape = 'u8[1024]{0}', space=vmem, size = 0x400, scoped, tag = 'output window, operand 0, single buffered']
    %24 = vsyncpa [#allocation7], 0
    %25 = vsyncpa [#allocation10], 0
    %26 = vsyncpa [#allocation8], 0
    // Predicated region
    $region2: #{tpu_custom_call.1} parent=1 // pred_check
      _
    $region3: #{tpu_custom_call.1} parent=1 // pred_check_branch
      %28 = sbr.rel (0) target = $region5
    $region4: #{tpu_custom_call.1} parent=1 // pred_region
      %s30 = ssub.s32 1024, 1024
      %31 = vsyncadd [#allocation7], %s30
      %s32 = sshll.u32 [#allocation6], 4
      %s33 = int_to_ptr.vmem [resolvable:$true] %s32
      %38 = dma.hbm_to_vmem [thread:$0]  %s1, 1024, %s33, [#allocation7], 128, 128, 8
    $region5: #{tpu_custom_call.1} parent=1 // pred_fallthru
      _
    // Predicated region
    $region6: #{tpu_custom_call.1} parent=1 // pred_check
      _
    $region7: #{tpu_custom_call.1} parent=1 // pred_check_branch
      %40 = sbr.rel (0) target = $region9
    $region8: #{tpu_custom_call.1} parent=1 // pred_region
      _
    $region9: #{tpu_custom_call.1} parent=1 // pred_fallthru
      _
    // Predicated region
    $region10: #{tpu_custom_call.1} parent=1 // pred_check
      _
    $region11: #{tpu_custom_call.1} parent=1 // pred_check_branch
      %42 = sbr.rel (0) target = $region13
    $region12: #{tpu_custom_call.1} parent=1 // pred_region
      _
    $region13: #{tpu_custom_call.1} parent=1 // pred_fallthru
      _
    // Predicated region
    $region14: #{tpu_custom_call.1} parent=1 // pred_check
      _
    $region15: #{tpu_custom_call.1} parent=1 // pred_check_branch
      %44 = sbr.rel (0) target = $region17
    $region16: #{tpu_custom_call.1} parent=1 // pred_region
      %s46 = ssub.s32 1024, 1024
      %47 = vsyncadd [#allocation10], %s46
      %s48 = sshll.u32 [#allocation9], 4
      %s49 = int_to_ptr.vmem [resolvable:$true] %s48
      %54 = dma.hbm_to_vmem [thread:$0]  %s4, 1024, %s49, [#allocation10], 64, 64, 4
    $region17: #{tpu_custom_call.1} parent=1 // pred_fallthru
      _
    // Predicated region
    $region18: #{tpu_custom_call.1} parent=1 // pred_check
      _
    $region19: #{tpu_custom_call.1} parent=1 // pred_check_branch
      %56 = sbr.rel (0) target = $region21
    $region20: #{tpu_custom_call.1} parent=1 // pred_region
      _
    $region21: #{tpu_custom_call.1} parent=1 // pred_fallthru
      _
    // Predicated region
    $region22: #{tpu_custom_call.1} parent=1 // pred_check
      _
    $region23: #{tpu_custom_call.1} parent=1 // pred_check_branch
      %58 = sbr.rel (0) target = $region25
    $region24: #{tpu_custom_call.1} parent=1 // pred_region
      %s60 = ssub.s32 1024, 1024
      %61 = vsyncadd [#allocation10], %s60
      %s62 = sshll.u32 [#allocation11], 4
      %s63 = int_to_ptr.vmem [resolvable:$true] %s62
      %68 = dma.hbm_to_vmem [thread:$0]  %s6, 1024, %s63, [#allocation10], 64, 64, 4
    $region25: #{tpu_custom_call.1} parent=1 // pred_fallthru
      _
    // Predicated region
    $region26: #{tpu_custom_call.1} parent=1 // pred_check
      _
    $region27: #{tpu_custom_call.1} parent=1 // pred_check_branch
      %70 = sbr.rel (0) target = $region29
    $region28: #{tpu_custom_call.1} parent=1 // pred_region
      _
    $region29: #{tpu_custom_call.1} parent=1 // pred_fallthru
      _
    // Predicated region
    $region30: #{tpu_custom_call.1} parent=1 // pred_check
      _
    $region31: #{tpu_custom_call.1} parent=1 // pred_check_branch
      %72 = sbr.rel (0) target = $region33
    $region32: #{tpu_custom_call.1} parent=1 // pred_region
      _
    $region33: #{tpu_custom_call.1} parent=1 // pred_fallthru
      _
    // Predicated region
    $region34: #{tpu_custom_call.1} parent=1 // pred_check
      _
    $region35: #{tpu_custom_call.1} parent=1 // pred_check_branch
      %74 = sbr.rel (0) target = $region37
    $region36: #{tpu_custom_call.1} parent=1 // pred_region
      _
    $region37: #{tpu_custom_call.1} parent=1 // pred_fallthru
      _
    // Predicated region
    $region38: #{tpu_custom_call.1} parent=1 // pred_check
      _
    $region39: #{tpu_custom_call.1} parent=1 // pred_check_branch
      %76 = sbr.rel (0) target = $region41
    $region40: #{tpu_custom_call.1} parent=1 // pred_region
      _
    $region41: #{tpu_custom_call.1} parent=1 // pred_fallthru
      _
    // Predicated region
    $region42: #{tpu_custom_call.1} parent=1 // pred_check
      _
    $region43: #{tpu_custom_call.1} parent=1 // pred_check_branch
      %78 = sbr.rel (0) target = $region45
    $region44: #{tpu_custom_call.1} parent=1 // pred_region
      %79 = dma.done [#allocation7], 1024
    $region45: #{tpu_custom_call.1} parent=1 // pred_fallthru
      _
    // Predicated region
    $region46: #{tpu_custom_call.1} parent=1 // pred_check
      _
    $region47: #{tpu_custom_call.1} parent=1 // pred_check_branch
      %81 = sbr.rel (0) target = $region49
    $region48: #{tpu_custom_call.1} parent=1 // pred_region
      %82 = dma.done [#allocation10], 1024
    $region49: #{tpu_custom_call.1} parent=1 // pred_fallthru
      _
    // Predicated region
    $region50: #{tpu_custom_call.1} parent=1 // pred_check
      _
    $region51: #{tpu_custom_call.1} parent=1 // pred_check_branch
      %84 = sbr.rel (0) target = $region53
    $region52: #{tpu_custom_call.1} parent=1 // pred_region
      %85 = dma.done [#allocation10], 1024
    $region53: #{tpu_custom_call.1} parent=1 // pred_fallthru
      _
    %s87 = smul.u32 0, 16
    %s88 = sld [smem:[#allocation4 + %s87]]
    %s89 = scalar_lea.vmem [#allocation6], %s88
    %v90 = vld [vmem:[%s89] sm:$0x1]
    %91 = vst [vmem:[#allocation2] sm:$0x1] %v90
    %s92 = sadd.s32 %s87, 1
    %s93 = sld [smem:[#allocation4 + %s92]]
    %s94 = scalar_lea.vmem [#allocation6], %s93
    %v95 = vld [vmem:[%s94] sm:$0x1]
    %96 = vst [vmem:[#allocation2 + $0x1] sm:$0x1] %v95
    %s97 = sadd.s32 %s87, 2
    %s98 = sld [smem:[#allocation4 + %s97]]
    %s99 = scalar_lea.vmem [#allocation6], %s98
    %v100 = vld [vmem:[%s99] sm:$0x1]
    %101 = vst [vmem:[#allocation2 + $0x2] sm:$0x1] %v100
    %s102 = sadd.s32 %s87, 3
    %s103 = sld [smem:[#allocation4 + %s102]]
    %s104 = scalar_lea.vmem [#allocation6], %s103
    %v105 = vld [vmem:[%s104] sm:$0x1]
    %106 = vst [vmem:[#allocation2 + $0x3] sm:$0x1] %v105
    %s107 = sadd.s32 %s87, 4
    %s108 = sld [smem:[#allocation4 + %s107]]
    %s109 = scalar_lea.vmem [#allocation6], %s108
    %v110 = vld [vmem:[%s109] sm:$0x1]
    %111 = vst [vmem:[#allocation2 + $0x4] sm:$0x1] %v110
    %s112 = sadd.s32 %s87, 5
    %s113 = sld [smem:[#allocation4 + %s112]]
    %s114 = scalar_lea.vmem [#allocation6], %s113
    %v115 = vld [vmem:[%s114] sm:$0x1]
    %116 = vst [vmem:[#allocation2 + $0x5] sm:$0x1] %v115
    %s117 = sadd.s32 %s87, 6
    %s118 = sld [smem:[#allocation4 + %s117]]
    %s119 = scalar_lea.vmem [#allocation6], %s118
    %v120 = vld [vmem:[%s119] sm:$0x1]
    %121 = vst [vmem:[#allocation2 + $0x6] sm:$0x1] %v120
    %s122 = sadd.s32 %s87, 7
    %s123 = sld [smem:[#allocation4 + %s122]]
    %s124 = scalar_lea.vmem [#allocation6], %s123
    %v125 = vld [vmem:[%s124] sm:$0x1]
    %126 = vst [vmem:[#allocation2 + $0x7] sm:$0x1] %v125
    %s127 = sadd.s32 %s87, 8
    %s128 = sld [smem:[#allocation4 + %s127]]
    %s129 = scalar_lea.vmem [#allocation6], %s128
    %v130 = vld [vmem:[%s129] sm:$0x1]
    %131 = vst [vmem:[#allocation2 + $0x8] sm:$0x1] %v130
    %s132 = sadd.s32 %s87, 9
    %s133 = sld [smem:[#allocation4 + %s132]]
    %s134 = scalar_lea.vmem [#allocation6], %s133
    %v135 = vld [vmem:[%s134] sm:$0x1]
    %136 = vst [vmem:[#allocation2 + $0x9] sm:$0x1] %v135
    %s137 = sadd.s32 %s87, 10
    %s138 = sld [smem:[#allocation4 + %s137]]
    %s139 = scalar_lea.vmem [#allocation6], %s138
    %v140 = vld [vmem:[%s139] sm:$0x1]
    %141 = vst [vmem:[#allocation2 + $0xa] sm:$0x1] %v140
    %s142 = sadd.s32 %s87, 11
    %s143 = sld [smem:[#allocation4 + %s142]]
    %s144 = scalar_lea.vmem [#allocation6], %s143
    %v145 = vld [vmem:[%s144] sm:$0x1]
    %146 = vst [vmem:[#allocation2 + $0xb] sm:$0x1] %v145
    %s147 = sadd.s32 %s87, 12
    %s148 = sld [smem:[#allocation4 + %s147]]
    %s149 = scalar_lea.vmem [#allocation6], %s148
    %v150 = vld [vmem:[%s149] sm:$0x1]
    %151 = vst [vmem:[#allocation2 + $0xc] sm:$0x1] %v150
    %s152 = sadd.s32 %s87, 13
    %s153 = sld [smem:[#allocation4 + %s152]]
    %s154 = scalar_lea.vmem [#allocation6], %s153
    %v155 = vld [vmem:[%s154] sm:$0x1]
    %156 = vst [vmem:[#allocation2 + $0xd] sm:$0x1] %v155
    %s157 = sadd.s32 %s87, 14
    %s158 = sld [smem:[#allocation4 + %s157]]
    %s159 = scalar_lea.vmem [#allocation6], %s158
    %v160 = vld [vmem:[%s159] sm:$0x1]
    %161 = vst [vmem:[#allocation2 + $0xe] sm:$0x1] %v160
    %s162 = sadd.s32 %s87, 15
    %s163 = sld [smem:[#allocation4 + %s162]]
    %s164 = scalar_lea.vmem [#allocation6], %s163
    %v165 = vld [vmem:[%s164] sm:$0x1]
    %166 = vst [vmem:[#allocation2 + $0xf] sm:$0x1] %v165
    %v167 = vld [vmem:[#allocation2] sm:$0xff]
    %v168 = vld [vmem:[#allocation2 + $0x8] sm:$0xff]
    %169 = vadd.xlane.f32.xlu0 %v167
    %v170 = vpop.xlane.xlu0 %169
    %171 = vadd.xlane.f32.xlu0 %v168
    %v172 = vpop.xlane.xlu0 %171
    %v173 = vrcp.pop 128.0
    %v174 = vmul.f32 %v170, %v173
    %v175 = vmul.f32 %v172, %v173
    %v176 = vsub.f32 %v167, %v174
    %v177 = vsub.f32 %v168, %v175
    %v178 = vmul.f32 %v176, %v176
    %v179 = vmul.f32 %v177, %v177
    %180 = vadd.xlane.f32.xlu0 %v178
    %v181 = vpop.xlane.xlu0 %180
    %182 = vadd.xlane.f32.xlu0 %v179
    %v183 = vpop.xlane.xlu0 %182
    %v184 = vmul.f32 %v181, %v173
    %v185 = vmul.f32 %v183, %v173
    %v186 = vadd.f32 %v184, 1e-05
    %v187 = vadd.f32 %v185, 1e-05
    %v188 = vrsqrt.pop %v186
    %v189 = vrsqrt.pop %v187
    %v190 = vmul.f32 %v176, %v188
    %v191 = vmul.f32 %v177, %v189
    %v192 = vld [vmem:[%s2] sm:$0x1]
    %v194 = vlaneseq
    %v195 = vshrl.u32 %v194, 7
    %v196 = vsub.s32 0, %v195
    %v197 = vrot.slane %v192, %v196
    %v199 = vmul.f32 %v190, %v197
    %v200 = vmul.f32 %v191, %v197
    %v201 = vld [vmem:[%s3] sm:$0x1]
    %v203 = vlaneseq
    %v204 = vshrl.u32 %v203, 7
    %v205 = vsub.s32 0, %v204
    %v206 = vrot.slane %v201, %v205
    %v208 = vadd.f32 %v199, %v206
    %v209 = vadd.f32 %v200, %v206
    %v210 = vpack.c.bf16 %v209, %v208
    %v211 = vld [vmem:[#allocation9] sm:$0xf]
    %v212 = vld [vmem:[#allocation9 + $0x4] sm:$0xf]
    %v213 = vld [vmem:[#allocation9 + $0x8] sm:$0xf]
    %v214 = vld [vmem:[#allocation9 + $0xc] sm:$0xf]
    %v215 = vld [vmem:[#allocation9 + $0x10] sm:$0xf]
    %v216 = vld [vmem:[#allocation9 + $0x14] sm:$0xf]
    %v217 = vld [vmem:[#allocation9 + $0x18] sm:$0xf]
    %v218 = vld [vmem:[#allocation9 + $0x1c] sm:$0xf]
    %v219 = vld [vmem:[#allocation9 + $0x20] sm:$0xf]
    %v220 = vld [vmem:[#allocation9 + $0x24] sm:$0xf]
    %v221 = vld [vmem:[#allocation9 + $0x28] sm:$0xf]
    %v222 = vld [vmem:[#allocation9 + $0x2c] sm:$0xf]
    %v223 = vld [vmem:[#allocation9 + $0x30] sm:$0xf]
    %v224 = vld [vmem:[#allocation9 + $0x34] sm:$0xf]
    %v225 = vld [vmem:[#allocation9 + $0x38] sm:$0xf]
    %v226 = vld [vmem:[#allocation9 + $0x3c] sm:$0xf]
    %v227 = vld [vmem:[%s5] sm:$0x1]
    %v229 = vlaneseq
    %v230 = vshrl.u32 %v229, 7
    %v231 = vsub.s32 0, %v230
    %v232 = vrot.slane %v227, %v231
    %v250 = vunpack.c.l.b16 %v211
    %v251 = vunpack.c.l.b16 %v212
    %v252 = vunpack.c.l.b16 %v213
    %v253 = vunpack.c.l.b16 %v214
    %v254 = vunpack.c.l.b16 %v215
    %v255 = vunpack.c.l.b16 %v216
    %v256 = vunpack.c.l.b16 %v217
    %v257 = vunpack.c.l.b16 %v218
    %v258 = vunpack.c.l.b16 %v219
    %v259 = vunpack.c.l.b16 %v220
    %v260 = vunpack.c.l.b16 %v221
    %v261 = vunpack.c.l.b16 %v222
    %v262 = vunpack.c.l.b16 %v223
    %v263 = vunpack.c.l.b16 %v224
    %v264 = vunpack.c.l.b16 %v225
    %v265 = vunpack.c.l.b16 %v226
    %v266 = vpack.c.b16 %v251, %v250
    %v267 = vpack.c.b16 %v253, %v252
    %v268 = vpack.c.b16 %v255, %v254
    %v269 = vpack.c.b16 %v257, %v256
    %v270 = vpack.c.b16 %v259, %v258
    %v271 = vpack.c.b16 %v261, %v260
    %v272 = vpack.c.b16 %v263, %v262
    %v273 = vpack.c.b16 %v265, %v264
    %282 = vmatprep.subr.bf16.mxu0 0
    %283 = vmatpush1.bf16.msra.mxu0 %v273
    %284 = vmatprep.subr.bf16.mxu0 0
    %285 = vmatpush1.bf16.msra.mxu0 %v272
    %286 = vmatprep.subr.bf16.mxu0 0
    %287 = vmatpush1.bf16.msra.mxu0 %v271
    %288 = vmatprep.subr.bf16.mxu0 0
    %289 = vmatpush1.bf16.msra.mxu0 %v270
    %290 = vmatprep.subr.bf16.mxu0 0
    %291 = vmatpush1.bf16.msra.mxu0 %v269
    %292 = vmatprep.subr.bf16.mxu0 0
    %293 = vmatpush1.bf16.msra.mxu0 %v268
    %294 = vmatprep.subr.bf16.mxu0 0
    %295 = vmatpush1.bf16.msra.mxu0 %v267
    %296 = vmatprep.subr.bf16.mxu0 0
    %297 = vmatpush1.bf16.msra.mxu0 %v266
    %298 = vmatprep.subr.bf16.mxu0 0
    %299 = vmatpush2.bf16.msra.mxu0 0
    %300 = vmatprep.subr.bf16.mxu0 0
    %301 = vmatpush2.bf16.msra.mxu0 0
    %302 = vmatprep.subr.bf16.mxu0 0
    %303 = vmatpush2.bf16.msra.mxu0 0
    %304 = vmatprep.subr.bf16.mxu0 0
    %305 = vmatpush2.bf16.msra.mxu0 0
    %306 = vmatprep.subr.bf16.mxu0 0
    %307 = vmatpush2.bf16.msra.mxu0 0
    %308 = vmatprep.subr.bf16.mxu0 0
    %309 = vmatpush2.bf16.msra.mxu0 0
    %310 = vmatprep.subr.bf16.mxu0 0
    %311 = vmatpush2.bf16.msra.mxu0 0
    %312 = vmatprep.subr.bf16.mxu0 0
    %313 = vmatpush2.bf16.msra.mxu0 0
    %314 = vmatprep.mubr.bf16.mxu0 0
    %315 = vmatmul.mubr.bf16.gmra.mxu0 %v210
    %v316 = vpop.f32.mrf.mxu0
    %v317 = vadd.f32 %v232, %v316
    %v318 = vpop.f32.mrf.mxu0
    %v319 = vpop.f32.mrf.mxu0
    %v320 = vadd.f32 %v232, %v319
    %v321 = vpop.f32.mrf.mxu0
    %322 = vdwg.mxu0
    %v323 = vmul.f32 %v317, 0.01
    %v324 = vmul.f32 %v320, 0.01
    %v325 = vmax.f32 %v317, %v323
    %v326 = vmax.f32 %v320, %v324
    %v327 = vpack.c.bf16 %v326, %v325
    %v328 = vld [vmem:[#allocation11] sm:$0xf]
    %v329 = vld [vmem:[#allocation11 + $0x4] sm:$0xf]
    %v330 = vld [vmem:[#allocation11 + $0x8] sm:$0xf]
    %v331 = vld [vmem:[#allocation11 + $0xc] sm:$0xf]
    %v332 = vld [vmem:[#allocation11 + $0x10] sm:$0xf]
    %v333 = vld [vmem:[#allocation11 + $0x14] sm:$0xf]
    %v334 = vld [vmem:[#allocation11 + $0x18] sm:$0xf]
    %v335 = vld [vmem:[#allocation11 + $0x1c] sm:$0xf]
    %v336 = vld [vmem:[#allocation11 + $0x20] sm:$0xf]
    %v337 = vld [vmem:[#allocation11 + $0x24] sm:$0xf]
    %v338 = vld [vmem:[#allocation11 + $0x28] sm:$0xf]
    %v339 = vld [vmem:[#allocation11 + $0x2c] sm:$0xf]
    %v340 = vld [vmem:[#allocation11 + $0x30] sm:$0xf]
    %v341 = vld [vmem:[#allocation11 + $0x34] sm:$0xf]
    %v342 = vld [vmem:[#allocation11 + $0x38] sm:$0xf]
    %v343 = vld [vmem:[#allocation11 + $0x3c] sm:$0xf]
    %v344 = vld [vmem:[%s7] sm:$0x1]
    %v346 = vlaneseq
    %v347 = vshrl.u32 %v346, 7
    %v348 = vsub.s32 0, %v347
    %v349 = vrot.slane %v344, %v348
    %v367 = vunpack.c.l.b16 %v328
    %v368 = vunpack.c.l.b16 %v329
    %v369 = vunpack.c.l.b16 %v330
    %v370 = vunpack.c.l.b16 %v331
    %v371 = vunpack.c.l.b16 %v332
    %v372 = vunpack.c.l.b16 %v333
    %v373 = vunpack.c.l.b16 %v334
    %v374 = vunpack.c.l.b16 %v335
    %v375 = vunpack.c.l.b16 %v336
    %v376 = vunpack.c.l.b16 %v337
    %v377 = vunpack.c.l.b16 %v338
    %v378 = vunpack.c.l.b16 %v339
    %v379 = vunpack.c.l.b16 %v340
    %v380 = vunpack.c.l.b16 %v341
    %v381 = vunpack.c.l.b16 %v342
    %v382 = vunpack.c.l.b16 %v343
    %v383 = vpack.c.b16 %v368, %v367
    %v384 = vpack.c.b16 %v370, %v369
    %v385 = vpack.c.b16 %v372, %v371
    %v386 = vpack.c.b16 %v374, %v373
    %v387 = vpack.c.b16 %v376, %v375
    %v388 = vpack.c.b16 %v378, %v377
    %v389 = vpack.c.b16 %v380, %v379
    %v390 = vpack.c.b16 %v382, %v381
    %399 = vmatprep.subr.bf16.mxu0 0
    %400 = vmatpush1.bf16.msra.mxu0 %v390
    %401 = vmatprep.subr.bf16.mxu0 0
    %402 = vmatpush1.bf16.msra.mxu0 %v389
    %403 = vmatprep.subr.bf16.mxu0 0
    %404 = vmatpush1.bf16.msra.mxu0 %v388
    %405 = vmatprep.subr.bf16.mxu0 0
    %406 = vmatpush1.bf16.msra.mxu0 %v387
    %407 = vmatprep.subr.bf16.mxu0 0
    %408 = vmatpush1.bf16.msra.mxu0 %v386
    %409 = vmatprep.subr.bf16.mxu0 0
    %410 = vmatpush1.bf16.msra.mxu0 %v385
    %411 = vmatprep.subr.bf16.mxu0 0
    %412 = vmatpush1.bf16.msra.mxu0 %v384
    %413 = vmatprep.subr.bf16.mxu0 0
    %414 = vmatpush1.bf16.msra.mxu0 %v383
    %415 = vmatprep.subr.bf16.mxu0 0
    %416 = vmatpush2.bf16.msra.mxu0 0
    %417 = vmatprep.subr.bf16.mxu0 0
    %418 = vmatpush2.bf16.msra.mxu0 0
    %419 = vmatprep.subr.bf16.mxu0 0
    %420 = vmatpush2.bf16.msra.mxu0 0
    %421 = vmatprep.subr.bf16.mxu0 0
    %422 = vmatpush2.bf16.msra.mxu0 0
    %423 = vmatprep.subr.bf16.mxu0 0
    %424 = vmatpush2.bf16.msra.mxu0 0
    %425 = vmatprep.subr.bf16.mxu0 0
    %426 = vmatpush2.bf16.msra.mxu0 0
    %427 = vmatprep.subr.bf16.mxu0 0
    %428 = vmatpush2.bf16.msra.mxu0 0
    %429 = vmatprep.subr.bf16.mxu0 0
    %430 = vmatpush2.bf16.msra.mxu0 0
    %431 = vmatprep.mubr.bf16.mxu0 0
    %432 = vmatmul.mubr.bf16.gmra.mxu0 %v327
    %v433 = vpop.f32.mrf.mxu0
    %v434 = vadd.f32 %v349, %v433
    %v435 = vpop.f32.mrf.mxu0
    %v436 = vpop.f32.mrf.mxu0
    %v437 = vadd.f32 %v349, %v436
    %v438 = vpop.f32.mrf.mxu0
    %439 = vdwg.mxu0
    %v440 = vmul.f32 %v434, 0.01
    %v441 = vmul.f32 %v437, 0.01
    %v442 = vmax.f32 %v434, %v440
    %v443 = vmax.f32 %v437, %v441
    %v444 = vld [vmem:[%s8] sm:$0x1]
    %v445 = vpack.c.bf16 %v443, %v442
    %vm446 = vcmask 130048
    %v448 = vsel %vm446, %v444, 0
    %450 = vmatprep.subr.bf16.mxu0 0
    %451 = vmatpush1.bf16.msra.mxu0 0
    %452 = vmatprep.subr.bf16.mxu0 0
    %453 = vmatpush1.bf16.msra.mxu0 0
    %454 = vmatprep.subr.bf16.mxu0 0
    %455 = vmatpush1.bf16.msra.mxu0 0
    %456 = vmatprep.subr.bf16.mxu0 0
    %457 = vmatpush1.bf16.msra.mxu0 0
    %458 = vmatprep.subr.bf16.mxu0 0
    %459 = vmatpush1.bf16.msra.mxu0 0
    %460 = vmatprep.subr.bf16.mxu0 0
    %461 = vmatpush1.bf16.msra.mxu0 0
    %462 = vmatprep.subr.bf16.mxu0 0
    %463 = vmatpush1.bf16.msra.mxu0 0
    %464 = vmatprep.subr.bf16.mxu0 0
    %465 = vmatpush1.bf16.msra.mxu0 %v445
    %466 = vmatprep.subr.bf16.mxu0 0
    %467 = vmatpush2.bf16.msra.mxu0 0
    %468 = vmatprep.subr.bf16.mxu0 0
    %469 = vmatpush2.bf16.msra.mxu0 0
    %470 = vmatprep.subr.bf16.mxu0 0
    %471 = vmatpush2.bf16.msra.mxu0 0
    %472 = vmatprep.subr.bf16.mxu0 0
    %473 = vmatpush2.bf16.msra.mxu0 0
    %474 = vmatprep.subr.bf16.mxu0 0
    %475 = vmatpush2.bf16.msra.mxu0 0
    %476 = vmatprep.subr.bf16.mxu0 0
    %477 = vmatpush2.bf16.msra.mxu0 0
    %478 = vmatprep.subr.bf16.mxu0 0
    %479 = vmatpush2.bf16.msra.mxu0 0
    %480 = vmatprep.subr.bf16.mxu0 0
    %481 = vmatpush2.bf16.msra.mxu0 0
    %482 = vmatprep.mubr.bf16.mxu0 0
    %483 = vmatmul.mubr.bf16.gmra.mxu0 %v448
    %v484 = vpop.f32.mrf.mxu0
    %v485 = vadd.f32 0.0, %v484
    %v486 = vpop.f32.mrf.mxu0
    %v487 = vpop.f32.mrf.mxu0
    %v488 = vpop.f32.mrf.mxu0
    %489 = vdwg.mxu0
    %v490 = vmul.f32 %v485, 0.125
    %v491 = vld [vmem:[%s9] sm:$0x1]
    %v493 = vlaneseq
    %v494 = vshrl.u32 %v493, 7
    %v495 = vsub.s32 0, %v494
    %v496 = vrot.slane %v491, %v495
    %v498 = vmul.f32 %v490, %v496
    %vm499 = vcmask 1041408
    %v500 = vsel %vm499, %v498, 0.0
    %501 = vadd.xlane.f32.xlu0 %v500
    %v502 = vpop.xlane.xlu0 %501
    %v503 = vld [vmem:[#allocation5] sm:$0x1]
    %v505 = vlaneseq
    %v506 = vshrl.u32 %v505, 7
    %v507 = vsub.s32 0, %v506
    %v508 = vrot.slane %v503, %v507
    %v510 = vadd.f32 %v502, %v508
    %512 = vset.pattern.permute.xlu0 0
    %513 = vperm.xlu0 %512, %v510
    %v514 = vpop.permute.xlu0 %513
    %516 = vst [vmem:[#allocation12] sm:$0x3] %v514
    // Predicated region
    $region54: #{tpu_custom_call.1} parent=1 // pred_check
      _
    $region55: #{tpu_custom_call.1} parent=1 // pred_check_branch
      %518 = sbr.rel (0) target = $region57
    $region56: #{tpu_custom_call.1} parent=1 // pred_region
      %s520 = ssub.s32 32, 32
      %521 = vsyncadd [#allocation8], %s520
      %s523 = sshll.u32 [#allocation12], 4
      %s524 = int_to_ptr.vmem [resolvable:$true] %s523
      %526 = dma.vmem_to_hbm [thread:$0]  %s524, 32, %s11, [#allocation8]
    $region57: #{tpu_custom_call.1} parent=1 // pred_fallthru
      _
    // Predicated region
    $region58: #{tpu_custom_call.1} parent=1 // pred_check
      _
    $region59: #{tpu_custom_call.1} parent=1 // pred_check_branch
      %528 = sbr.rel (0) target = $region61
    $region60: #{tpu_custom_call.1} parent=1 // pred_region
      %529 = dma.done [#allocation8], 32
    $region61: #{tpu_custom_call.1} parent=1 // pred_fallthru
      _
    %530 = vsyncpa [#allocation7], 1
    %531 = vsyncpa [#allocation10], 1
    %532 = vsyncpa [#allocation8], 1

</llo_original>
